<compile_context>
chip_gen: v7x
topology: tpu7x:2x2x1
jax: 0.10.0
libtpu: 0.0.40
codegen_flags: <defaults>
</compile_context>

<pallas_src>
import functools

import numpy as np
import jax
import jax.numpy as jnp
from jax import lax
from jax.experimental import pallas as pl
from jax.experimental.pallas import tpu as pltpu

K = 3  # conv kernel size

# ---------------------------------------------------------------------------
# Tiling / VMEM budget (perf review items 1, 5, 6, 7).
# Each grid step moves ~2x this target (in + out) and builds a 9x im2col slab
# as a traced VMEM value, so live VMEM per step is roughly 13-15x the target.
#   v5e : 16 MiB scoped default / 128 MiB physical, 1 vst slot  -> 512 KiB ok.
#   v6e : 32 MiB scoped default / 128 MiB physical              -> could 2x it.
#   v7x : 64 MiB physical (32 MiB scoped default)               -> keep 512 KiB,
#         do not raise vmem_limit much beyond ~48 MiB.
# TODO(synk): for single images larger than the target (e.g. 3x512x512) tile
# over H with a 1-row halo instead of whole-image lane blocks.
# ---------------------------------------------------------------------------
_TARGET_BLOCK_BYTES = 512 * 1024
_VMEM_LIMIT_BYTES = 32 * 1024 * 1024


def _pick_block_samples(n, hw, bytes_per_sample):
    """Largest divisor of n whose per-step input block stays near the target.

    Falls back to the whole batch when HW is not a multiple of 128 (then the
    lane block dim must equal the full array dim)."""
    if hw % 128 != 0:
        return n
    max_nb = max(1, min(n, _TARGET_BLOCK_BYTES // max(bytes_per_sample, 1)))
    for nb in range(max_nb, 0, -1):
        if n % nb == 0:
            return nb
    return 1


@functools.lru_cache(maxsize=None)
def _roll_mode():
    """Probe pltpu.roll's lane-rotation convention once (cached, eager).

    +1 : pltpu.roll(x, s, axis) == jnp.roll(x, s, axis)   (expected)
    -1 : opposite rotation direction
     0 : roll unusable here -> use the zero-fill concat fallback (VPU path).
    """
    try:
        rows, lanes, s = 4, 512, 5

        def probe(x_ref, o_ref):
            o_ref[...] = pltpu.roll(x_ref[...], s, 1)

        x = jnp.arange(rows * lanes, dtype=jnp.float32).reshape(rows, lanes)
        out = pl.pallas_call(
            probe, out_shape=jax.ShapeDtypeStruct((rows, lanes), jnp.float32)
        )(x)
        out = np.asarray(jax.block_until_ready(out))
        xn = np.asarray(x)
        if np.array_equal(out, np.roll(xn, s, axis=1)):
            return 1
        if np.array_equal(out, np.roll(xn, -s, axis=1)):
            return -1
    except Exception:  # lowering / tracing not supported -> safe fallback
        pass
    return 0


# ----------------------------------------------------------------------------
# Pallas kernel: one block of Nb samples,  y = x - (conv3x3(x, W') + b')
# in a lane-dense (C, Nb*H*W) layout.  W'/b' already contain the sigma scaling
# (and, for the equivariant paths, the group rotation / averaging).
# ----------------------------------------------------------------------------
def _conv_denoise_kernel(x_ref, w_ref, b_ref, o_ref, *, height, width, shift_mode):
    # x_ref : (C, Lb)        Lb = Nb*H*W, channels on sublanes, lane-dense
    # w_ref : (C_pad, 9*C)   sigma-scaled (group-folded) weights, tap-major
    # b_ref : (C, 1)         sigma-scaled bias
    # o_ref : (C, Lb)
    c = x_ref.shape[0]
    lb = x_ref.shape[1]
    x = x_ref[...].astype(jnp.float32)

    # Boundary masks, computed ONCE per grid step (hoisted out of the tap
    # loop: broadcast_in_dim is not CSE'd by JAX).
    q = lax.broadcasted_iota(jnp.int32, (1, lb), 1)          # flat lane index
    if width & (width - 1) == 0:
        col = q & (width - 1)
        qw = q >> (width.bit_length() - 1)
    else:
        col = q % width
        qw = q // width
    row = (qw & (height - 1)) if height & (height - 1) == 0 else (qw % height)
    row_ge1 = row >= 1               # valid output rows for tap dy = -1
    row_lt = row < (height - 1)      # valid output rows for tap dy = +1
    col_ge1 = col >= 1               # dx = -1
    col_lt = col < (width - 1)       # dx = +1

    def lane_shift(v, s):
        # shifted[q] = v[q + s]; wrap across rows / samples is killed by masks.
        if s == 0:
            return v
        if shift_mode != 0:
            # XLU rotate (frees VALU / vst slots during the slab build).
            amt = (-s if shift_mode > 0 else s) % lb
            return pltpu.roll(v, amt, 1)
        # Portable fallback: zero-filled lane shift (select/copy on the VPU).
        if s > 0:
            return jnp.concatenate([v[:, s:], jnp.zeros((c, s), v.dtype)], axis=1)
        return jnp.concatenate([jnp.zeros((c, -s), v.dtype), v[:, : lb + s]], axis=1)

    # im2col slab as a traced value (no scratch round-trip / misaligned vst).
    taps = []
    for dy in (-1, 0, 1):
        for dx in (-1, 0, 1):
            t = lane_shift(x, dy * width + dx)
            m = None
            if dy > 0:
                m = row_lt
            elif dy < 0:
                m = row_ge1
            if dx > 0:
                m = col_lt if m is None else (m & col_lt)
            elif dx < 0:
                m = col_ge1 if m is None else (m & col_ge1)
            if m is not None:
                t = jnp.where(m, t, 0.0)
            taps.append(t)
    slab = jnp.concatenate(taps, axis=0)                     # (9*C, Lb)

    # ONE MXU matmul: (C_pad, 9C) @ (9C, Lb) -> (C_pad, Lb), lane-dense.
    # Optional (v6e/v7x): cast slab + weights to bf16 (keep f32 accumulate) to
    # halve slab footprint / MXU passes; kept f32 here for tolerance margin.
    conv = jnp.dot(w_ref[...], slab, preferred_element_type=jnp.float32)
    if conv.shape[0] != c:
        conv = conv[:c, :]
    o_ref[...] = (x - (conv + b_ref[...])).astype(o_ref.dtype)


@functools.partial(jax.jit, static_argnames=("shift_mode",))
def _equivariant_conv_forward(x_nchw, w_eff_hwio, b_eff, *, shift_mode):
    n, c, h, w = x_nchw.shape
    hw = h * w
    nb = _pick_block_samples(n, hw, c * hw * 4)
    lb = nb * hw

    # Wrapper-side layout plumbing: present a single lane-dense slab
    # (channels on sublanes, batch*spatial on lanes).  One XLA transpose each
    # way; it disappears entirely if the producer is already channel-major.
    x2 = jnp.transpose(x_nchw.reshape(n, c, hw), (1, 0, 2)).reshape(c, n * hw)

    # (Cout, 9*Cin) tap-major weights; rows zero-padded to a multiple of 8
    # sublanes so the MXU result tile is not a sub-8-sublane fragment.
    wmat = jnp.transpose(jnp.asarray(w_eff_hwio, jnp.float32),
                         (3, 0, 1, 2)).reshape(c, K * K * c)
    c_pad = ((c + 7) // 8) * 8
    if c_pad != c:
        wmat = jnp.concatenate(
            [wmat, jnp.zeros((c_pad - c, K * K * c), jnp.float32)], axis=0)
    bcol = jnp.asarray(b_eff, jnp.float32).reshape(c, 1)

    kernel = functools.partial(_conv_denoise_kernel, height=h, width=w,
                               shift_mode=shift_mode)
    y2 = pl.pallas_call(
        kernel,
        out_shape=jax.ShapeDtypeStruct((c, n * hw), x_nchw.dtype),
        grid=(n // nb,),
        in_specs=[
            pl.BlockSpec((c, lb), lambda i: (0, i)),             # Nb-sample slab
            pl.BlockSpec((c_pad, K * K * c), lambda i: (0, 0)),  # resident W
            pl.BlockSpec((c, 1), lambda i: (0, 0)),              # resident bias
        ],
        out_specs=pl.BlockSpec((c, lb), lambda i: (0, i)),
        # Batch-block iterations are independent.  NOTE: on single-TC chips
        # (v5e/v6e) "parallel" vs "arbitrary" is a wash; true v7x 2-TC
        # sharding would use CORE_PARALLEL / core_map once per-step blocks
        # are large -- left as plain "parallel" here (no over-promise).
        compiler_params=pltpu.CompilerParams(
            dimension_semantics=("parallel",),
            vmem_limit_bytes=_VMEM_LIMIT_BYTES,
        ),
    )(x2, wmat, bcol)
    return jnp.transpose(y2.reshape(c, n, hw), (1, 0, 2)).reshape(n, c, h, w)


def pallas_conv_denoiser(x_nchw, w_eff_hwio, b_eff):
    """y = x - (conv3x3(x, w_eff) + b_eff), NCHW, zero SAME padding.

    w_eff / b_eff must already contain the sigma scaling (and any group
    rotation / averaging)."""
    return _equivariant_conv_forward(x_nchw, w_eff_hwio, b_eff,
                                     shift_mode=_roll_mode())


# ----------------------------------------------------------------------------
# Group action folded into the 3x3 conv weights (exact for a linear conv
# denoiser with zero SAME padding).
# ----------------------------------------------------------------------------
def _group_weights(w_hwio, idx):
    """W_g such that conv(x, W_g) = T_g^{-1}(conv(T_g(x), W)) for group element
    `idx` (numbering of denoise_rotate_flip_fn)."""
    k = idx % 4
    w = jnp.rot90(w_hwio, k=(4 - k) % 4, axes=(0, 1))  # image rot_k -> kernel rot_{-k}
    if idx >= 4:
        w = jnp.flip(w, axis=1)                        # image hflip -> kernel hflip
    return w


class PallasConvDenoiser:
    """Synthetic linear denoiser D_sigma(x) = x - sigma*(conv3x3(x,W)+b), NCHW."""

    is_linear_conv = True  # enables exact group folding in EquivariantDenoiser

    def __init__(self, w_hwio, b):
        self.w_hwio = jnp.asarray(w_hwio, jnp.float32)       # (3, 3, C, C)
        self.b = jnp.asarray(b, jnp.float32).reshape(-1)     # (C,)

    def apply_with_weights(self, x_nchw, sigma, w_hwio):
        sig = jnp.asarray(sigma, jnp.float32)
        # sigma folded into weights/bias (O(9*C*C) instead of O(N*H*W*C)).
        return pallas_conv_denoiser(x_nchw, sig * w_hwio, sig * self.b)

    def group_weights(self, idx):
        return _group_weights(self.w_hwio, idx)

    def __call__(self, x_nchw, sigma):
        return self.apply_with_weights(x_nchw, sigma, self.w_hwio)


# ----------------------------------------------------------------------------
# Faithful port of the PyTorch wrapper (generic path + fused fast path)
# ----------------------------------------------------------------------------
def hflip(x):
    return jnp.flip(x, axis=-1)


def rot1(x):
    return jnp.rot90(x, k=1, axes=(-2, -1))


def rot2(x):
    return jnp.rot90(x, k=2, axes=(-2, -1))


def rot3(x):
    return jnp.rot90(x, k=3, axes=(-2, -1))


def denoise_rotate_flip_fn(denoiser, x, sigma_den, idx):
    if idx == 0:
        return denoiser(x, sigma_den)
    if idx == 1:
        return rot3(denoiser(rot1(x), sigma_den))
    if idx == 2:
        return rot2(denoiser(rot2(x), sigma_den))
    if idx == 3:
        return rot1(denoiser(rot3(x), sigma_den))
    if idx == 4:
        return hflip(denoiser(hflip(x), sigma_den))
    if idx == 5:
        return hflip(rot3(denoiser(rot1(hflip(x)), sigma_den)))
    if idx == 6:
        return hflip(rot2(denoiser(rot2(hflip(x)), sigma_den)))
    if idx == 7:
        return hflip(rot1(denoiser(rot3(hflip(x)), sigma_den)))
    raise ValueError(idx)


def _draw_idx(rotations, flips):
    # TODO(synk): host-side np.random draw (matches the PyTorch module's
    # per-forward sampling); under jax.jit it would freeze to a constant.
    if rotations:
        return int(np.random.randint(8)) if flips else int(np.random.randint(4))
    if flips:
        return int(np.random.choice([4, 6]))
    raise ValueError("need rotations and/or flips")


def _group_indices(rotations, flips):
    if rotations:
        return list(range(8)) if flips else list(range(4))
    if flips:
        return [4, 6]
    raise ValueError("need rotations and/or flips")


def denoise_rotate(denoiser, image, sigma, rotations=True, flips=False, random=True):
    """Generic (non-fused) path for an arbitrary denoiser."""
    if random:
        idx = _draw_idx(rotations, flips)
        return denoise_rotate_flip_fn(denoiser, image, sigma, idx)
    list_idx = _group_indices(rotations, flips)
    denoised = jnp.zeros_like(image)
    for idx in list_idx:
        denoised = denoised + denoise_rotate_flip_fn(denoiser, image, sigma, idx)
    return denoised / len(list_idx)


class EquivariantDenoiser:
    def __init__(self, denoiser, transform="rotations", random=True):
        self.denoiser = denoiser
        self.rotations = "rot" in transform
        self.flips = "flip" in transform
        self.random = random

    def __call__(self, x, sigma):
        den = self.denoiser
        if not getattr(den, "is_linear_conv", False):
            # Arbitrary denoiser: faithful per-group-member path.
            return denoise_rotate(den, x, sigma, rotations=self.rotations,
                                  flips=self.flips, random=self.random)
        # Linear zero-SAME-padded conv denoiser: fold T_g into the weights so
        # the whole equivariant forward is a single pallas_call.
        if self.random:
            idx = _draw_idx(self.rotations, self.flips)
            return den.apply_with_weights(x, sigma, den.group_weights(idx))
        idxs = _group_indices(self.rotations, self.flips)
        w_bar = sum(den.group_weights(i) for i in idxs) / float(len(idxs))
        return den.apply_with_weights(x, sigma, w_bar)


# ----------------------------------------------------------------------------
# Pure-JAX reference denoiser (for correctness check of the Pallas path)
# ----------------------------------------------------------------------------
def make_ref_denoiser(w_hwio, b):
    w_hwio = jnp.asarray(w_hwio, jnp.float32)
    b = jnp.asarray(b, jnp.float32).reshape(-1)

    def ref_denoiser(x_nchw, sigma):
        x_nhwc = jnp.transpose(x_nchw, (0, 2, 3, 1))
        conv = lax.conv_general_dilated(
            x_nhwc, w_hwio, (1, 1), "SAME",
            dimension_numbers=("NHWC", "HWIO", "NHWC"),
            precision=lax.Precision.HIGHEST)
        y = x_nhwc - sigma * (conv + b.reshape(1, 1, 1, -1))
        return jnp.transpose(y, (0, 3, 1, 2))

    return ref_denoiser


if __name__ == "__main__":
    B, C, H, W = 2, 4, 16, 16
    sigma = 0.1

    key = jax.random.PRNGKey(0)
    kx, kw, kb = jax.random.split(key, 3)
    x = jax.random.normal(kx, (B, C, H, W), dtype=jnp.float32)            # NCHW
    w_hwio = 0.1 * jax.random.normal(kw, (K, K, C, C), dtype=jnp.float32)
    bias = 0.05 * jax.random.normal(kb, (1, C), dtype=jnp.float32)

    pallas_den = PallasConvDenoiser(w_hwio, bias)
    ref_den = make_ref_denoiser(w_hwio, bias)

    # 1) deterministic average over the 4 rotations -> one fused pallas_call
    model = EquivariantDenoiser(pallas_den, transform="rotations", random=False)
    out = jax.block_until_ready(model(x, sigma))
    ref_model = EquivariantDenoiser(ref_den, transform="rotations", random=False)
    ref = jax.block_until_ready(ref_model(x, sigma))
    assert out.shape == (B, C, H, W) and out.dtype == jnp.float32
    np.testing.assert_allclose(np.asarray(out), np.asarray(ref),
                               rtol=1e-3, atol=1e-3)

    # 2) full rotoflip group (8 elements) -> still one fused pallas_call
    model8 = EquivariantDenoiser(pallas_den, transform="rotoflips", random=False)
    ref8 = EquivariantDenoiser(ref_den, transform="rotoflips", random=False)
    np.testing.assert_allclose(
        np.asarray(jax.block_until_ready(model8(x, sigma))),
        np.asarray(jax.block_until_ready(ref8(x, sigma))),
        rtol=1e-3, atol=1e-3)

    # 3) every single group element (validates the weight-folding used by the
    #    Monte-Carlo random=True path) vs. the image-transform reference.
    for idx in range(8):
        fused = pallas_den.apply_with_weights(x, sigma, pallas_den.group_weights(idx))
        generic = denoise_rotate_flip_fn(ref_den, x, sigma, idx)
        np.testing.assert_allclose(
            np.asarray(jax.block_until_ready(fused)),
            np.asarray(jax.block_until_ready(generic)),
            rtol=1e-3, atol=1e-3)

    # 4) generic (non-fused) path with an "arbitrary" denoiser wrapping the
    #    Pallas conv kernel (exercises the rot/flip glue around pallas_call).
    generic_model = EquivariantDenoiser(lambda xx, ss: pallas_den(xx, ss),
                                        transform="rotations", random=False)
    np.testing.assert_allclose(
        np.asarray(jax.block_until_ready(generic_model(x, sigma))),
        np.asarray(ref), rtol=1e-3, atol=1e-3)

    # 5) Monte-Carlo (random=True) smoke test: shape / finiteness only.
    mc_model = EquivariantDenoiser(pallas_den, transform="rotoflips", random=True)
    y_mc = jax.block_until_ready(mc_model(x, sigma))
    assert y_mc.shape == (B, C, H, W) and bool(jnp.all(jnp.isfinite(y_mc)))

    print("KERNEL_OK")
</pallas_src>

<mosaic_0001>
module attributes {stable_mosaic.version = 11 : i64} {
  func.func @probe(%arg0: memref<4x512xf32, #tpu.memory_space<vmem>>, %arg1: memref<4x512xf32, #tpu.memory_space<vmem>>) attributes {dimension_semantics = [], scalar_prefetch = 0 : i64, scratch_operands = 0 : i64, tpu.core_type = #tpu.core_type<tc>} {
    %c0 = arith.constant 0 : index
    %c0_0 = arith.constant 0 : index
    %0 = vector.load %arg0[%c0, %c0_0] : memref<4x512xf32, #tpu.memory_space<vmem>>, vector<4x512xf32>
    %c5_i32 = arith.constant 5 : i32
    %1 = tpu.dynamic_rotate %0 by %c5_i32 dim 1 : vector<4x512xf32>, i32 -> vector<4x512xf32>
    %c0_1 = arith.constant 0 : index
    %c0_2 = arith.constant 0 : index
    %2 = vector.load %arg1[%c0_1, %c0_2] : memref<4x512xf32, #tpu.memory_space<vmem>>, vector<4x512xf32>
    tpu.vector_store %arg1[%c0_1, %c0_2], %1 {strides = array<i32>} : memref<4x512xf32, #tpu.memory_space<vmem>>, vector<4x512xf32>,
    return
  }
}

module attributes {stable_mosaic.version = 11 : i64} {
  func.func @_conv_denoise_kernel(%arg0: i32, %arg1: memref<4x512xf32, #tpu.memory_space<vmem>>, %arg2: memref<8x36xf32, #tpu.memory_space<vmem>>, %arg3: memref<4x1xf32, #tpu.memory_space<vmem>>, %arg4: memref<4x512xf32, #tpu.memory_space<vmem>>) attributes {dimension_semantics = [#tpu.dimension_semantics<parallel>], iteration_bounds = array<i64: 1>, scalar_prefetch = 0 : i64, scratch_operands = 0 : i64, tpu.core_type = #tpu.core_type<tc>, window_params = [{transform_indices = @transform_0, window_bounds = array<i64: 4, 512>}, {pipeline_mode = #tpu.pipeline_mode<synchronous>, transform_indices = @transform_1, window_bounds = array<i64: 8, 36>}, {pipeline_mode = #tpu.pipeline_mode<synchronous>, transform_indices = @transform_2, window_bounds = array<i64: 4, 1>}, {transform_indices = @transform_3, window_bounds = array<i64: 4, 512>}]} {
    %c0 = arith.constant 0 : index
    %c0_0 = arith.constant 0 : index
    %0 = vector.load %arg1[%c0, %c0_0] : memref<4x512xf32, #tpu.memory_space<vmem>>, vector<4x512xf32>
    %1 = tpu.iota {dimensions = array<i32: 1>} : vector<1x512xi32>
    %c15_i32 = arith.constant 15 : i32
    %2 = vector.broadcast %c15_i32 : i32 to vector<1x512xi32>
    %3 = arith.andi %1, %2 : vector<1x512xi32>
    %c4_i32 = arith.constant 4 : i32
    %4 = vector.broadcast %c4_i32 : i32 to vector<1x512xi32>
    %5 = arith.shrsi %1, %4 : vector<1x512xi32>
    %c15_i32_1 = arith.constant 15 : i32
    %6 = vector.broadcast %c15_i32_1 : i32 to vector<1x512xi32>
    %7 = arith.andi %5, %6 : vector<1x512xi32>
    %c1_i32 = arith.constant 1 : i32
    %8 = vector.broadcast %c1_i32 : i32 to vector<1x512xi32>
    %9 = arith.cmpi sge, %7, %8 : vector<1x512xi32>
    %c15_i32_2 = arith.constant 15 : i32
    %10 = vector.broadcast %c15_i32_2 : i32 to vector<1x512xi32>
    %11 = arith.cmpi slt, %7, %10 : vector<1x512xi32>
    %c1_i32_3 = arith.constant 1 : i32
    %12 = vector.broadcast %c1_i32_3 : i32 to vector<1x512xi32>
    %13 = arith.cmpi sge, %3, %12 : vector<1x512xi32>
    %c15_i32_4 = arith.constant 15 : i32
    %14 = vector.broadcast %c15_i32_4 : i32 to vector<1x512xi32>
    %15 = arith.cmpi slt, %3, %14 : vector<1x512xi32>
    %cst = arith.constant 0.000000e+00 : f32
    %16 = vector.broadcast %cst : f32 to vector<4x17xf32>
    %17 = vector.extract_strided_slice %0 {offsets = [0, 0], sizes = [4, 495], strides = [1, 1]} : vector<4x512xf32> to vector<4x495xf32>
    %18 = tpu.concatenate %16, %17 in 1 : vector<4x17xf32>, vector<4x495xf32> -> vector<4x512xf32>
    %19 = arith.andi %9, %13 : vector<1x512xi1>
    %cst_5 = arith.constant 0.000000e+00 : f32
    %20 = vector.shape_cast %19 : vector<1x512xi1> to vector<1x512xi1>
    %21 = vector.broadcast %20 : vector<1x512xi1> to vector<4x512xi1>
    %22 = vector.broadcast %cst_5 : f32 to vector<4x512xf32>
    %23 = arith.select %21, %18, %22 : vector<4x512xi1>, vector<4x512xf32>
    %cst_6 = arith.constant 0.000000e+00 : f32
    %24 = vector.broadcast %cst_6 : f32 to vector<4x16xf32>
    %25 = vector.extract_strided_slice %0 {offsets = [0, 0], sizes = [4, 496], strides = [1, 1]} : vector<4x512xf32> to vector<4x496xf32>
    %26 = tpu.concatenate %24, %25 in 1 : vector<4x16xf32>, vector<4x496xf32> -> vector<4x512xf32>
    %cst_7 = arith.constant 0.000000e+00 : f32
    %27 = vector.shape_cast %9 : vector<1x512xi1> to vector<1x512xi1>
    %28 = vector.broadcast %27 : vector<1x512xi1> to vector<4x512xi1>
    %29 = vector.broadcast %cst_7 : f32 to vector<4x512xf32>
    %30 = arith.select %28, %26, %29 : vector<4x512xi1>, vector<4x512xf32>
    %cst_8 = arith.constant 0.000000e+00 : f32
    %31 = vector.broadcast %cst_8 : f32 to vector<4x15xf32>
    %32 = vector.extract_strided_slice %0 {offsets = [0, 0], sizes = [4, 497], strides = [1, 1]} : vector<4x512xf32> to vector<4x497xf32>
    %33 = tpu.concatenate %31, %32 in 1 : vector<4x15xf32>, vector<4x497xf32> -> vector<4x512xf32>
    %34 = arith.andi %9, %15 : vector<1x512xi1>
    %cst_9 = arith.constant 0.000000e+00 : f32
    %35 = vector.shape_cast %34 : vector<1x512xi1> to vector<1x512xi1>
    %36 = vector.broadcast %35 : vector<1x512xi1> to vector<4x512xi1>
    %37 = vector.broadcast %cst_9 : f32 to vector<4x512xf32>
    %38 = arith.select %36, %33, %37 : vector<4x512xi1>, vector<4x512xf32>
    %cst_10 = arith.constant 0.000000e+00 : f32
    %39 = vector.broadcast %cst_10 : f32 to vector<4x1xf32>
    %40 = vector.extract_strided_slice %0 {offsets = [0, 0], sizes = [4, 511], strides = [1, 1]} : vector<4x512xf32> to vector<4x511xf32>
    %41 = tpu.concatenate %39, %40 in 1 : vector<4x1xf32>, vector<4x511xf32> -> vector<4x512xf32>
    %cst_11 = arith.constant 0.000000e+00 : f32
    %42 = vector.shape_cast %13 : vector<1x512xi1> to vector<1x512xi1>
    %43 = vector.broadcast %42 : vector<1x512xi1> to vector<4x512xi1>
    %44 = vector.broadcast %cst_11 : f32 to vector<4x512xf32>
    %45 = arith.select %43, %41, %44 : vector<4x512xi1>, vector<4x512xf32>
    %46 = vector.extract_strided_slice %0 {offsets = [0, 1], sizes = [4, 511], strides = [1, 1]} : vector<4x512xf32> to vector<4x511xf32>
    %cst_12 = arith.constant 0.000000e+00 : f32
    %47 = vector.broadcast %cst_12 : f32 to vector<4x1xf32>
    %48 = tpu.concatenate %46, %47 in 1 : vector<4x511xf32>, vector<4x1xf32> -> vector<4x512xf32>
    %cst_13 = arith.constant 0.000000e+00 : f32
    %49 = vector.shape_cast %15 : vector<1x512xi1> to vector<1x512xi1>
    %50 = vector.broadcast %49 : vector<1x512xi1> to vector<4x512xi1>
    %51 = vector.broadcast %cst_13 : f32 to vector<4x512xf32>
    %52 = arith.select %50, %48, %51 : vector<4x512xi1>, vector<4x512xf32>
    %53 = vector.extract_strided_slice %0 {offsets = [0, 15], sizes = [4, 497], strides = [1, 1]} : vector<4x512xf32> to vector<4x497xf32>
    %cst_14 = arith.constant 0.000000e+00 : f32
    %54 = vector.broadcast %cst_14 : f32 to vector<4x15xf32>
    %55 = tpu.concatenate %53, %54 in 1 : vector<4x497xf32>, vector<4x15xf32> -> vector<4x512xf32>
    %56 = arith.andi %11, %13 : vector<1x512xi1>
    %cst_15 = arith.constant 0.000000e+00 : f32
    %57 = vector.shape_cast %56 : vector<1x512xi1> to vector<1x512xi1>
    %58 = vector.broadcast %57 : vector<1x512xi1> to vector<4x512xi1>
    %59 = vector.broadcast %cst_15 : f32 to vector<4x512xf32>
    %60 = arith.select %58, %55, %59 : vector<4x512xi1>, vector<4x512xf32>
    %61 = vector.extract_strided_slice %0 {offsets = [0, 16], sizes = [4, 496], strides = [1, 1]} : vector<4x512xf32> to vector<4x496xf32>
    %cst_16 = arith.constant 0.000000e+00 : f32
    %62 = vector.broadcast %cst_16 : f32 to vector<4x16xf32>
    %63 = tpu.concatenate %61, %62 in 1 : vector<4x496xf32>, vector<4x16xf32> -> vector<4x512xf32>
    %cst_17 = arith.constant 0.000000e+00 : f32
    %64 = vector.shape_cast %11 : vector<1x512xi1> to vector<1x512xi1>
    %65 = vector.broadcast %64 : vector<1x512xi1> to vector<4x512xi1>
    %66 = vector.broadcast %cst_17 : f32 to vector<4x512xf32>
    %67 = arith.select %65, %63, %66 : vector<4x512xi1>, vector<4x512xf32>
    %68 = vector.extract_strided_slice %0 {offsets = [0, 17], sizes = [4, 495], strides = [1, 1]} : vector<4x512xf32> to vector<4x495xf32>
    %cst_18 = arith.constant 0.000000e+00 : f32
    %69 = vector.broadcast %cst_18 : f32 to vector<4x17xf32>
    %70 = tpu.concatenate %68, %69 in 1 : vector<4x495xf32>, vector<4x17xf32> -> vector<4x512xf32>
    %71 = arith.andi %11, %15 : vector<1x512xi1>
    %cst_19 = arith.constant 0.000000e+00 : f32
    %72 = vector.shape_cast %71 : vector<1x512xi1> to vector<1x512xi1>
    %73 = vector.broadcast %72 : vector<1x512xi1> to vector<4x512xi1>
    %74 = vector.broadcast %cst_19 : f32 to vector<4x512xf32>
    %75 = arith.select %73, %70, %74 : vector<4x512xi1>, vector<4x512xf32>
    %76 = tpu.concatenate %23, %30, %38, %45, %0, %52, %60, %67, %75 in 0 : vector<4x512xf32>, vector<4x512xf32>, vector<4x512xf32>, vector<4x512xf32>, vector<4x512xf32>, vector<4x512xf32>, vector<4x512xf32>, vector<4x512xf32>, vector<4x512xf32> -> vector<36x512xf32>
    %c0_20 = arith.constant 0 : index
    %c0_21 = arith.constant 0 : index
    %77 = vector.load %arg2[%c0_20, %c0_21] : memref<8x36xf32, #tpu.memory_space<vmem>>, vector<8x36xf32>
    %cst_22 = arith.constant dense<0.000000e+00> : vector<8x512xf32>
    %78 = tpu.matmul %77, %76, %cst_22 {dimension_numbers = #tpu.dot_dimension_numbers<[1], [0], [0], [1], [0, 0, 1, 1], [], []>} : vector<8x36xf32>, vector<36x512xf32>, vector<8x512xf32> -> vector<8x512xf32>
    %79 = vector.extract_strided_slice %78 {offsets = [0, 0], sizes = [4, 512], strides = [1, 1]} : vector<8x512xf32> to vector<4x512xf32>
    %c0_23 = arith.constant 0 : index
    %c0_24 = arith.constant 0 : index
    %80 = vector.load %arg3[%c0_23, %c0_24] : memref<4x1xf32, #tpu.memory_space<vmem>>, vector<4x1xf32>
    %81 = vector.broadcast %80 : vector<4x1xf32> to vector<4x512xf32>
    %82 = arith.addf %79, %81 : vector<4x512xf32>
    %83 = arith.subf %0, %82 : vector<4x512xf32>
    %c0_25 = arith.constant 0 : index
    %c0_26 = arith.constant 0 : index
    %84 = vector.load %arg4[%c0_25, %c0_26] : memref<4x512xf32, #tpu.memory_space<vmem>>, vector<4x512xf32>
    tpu.vector_store %arg4[%c0_25, %c0_26], %83 {strides = array<i32>} : memref<4x512xf32, #tpu.memory_space<vmem>>, vector<4x512xf32>,
    return
  }
  func.func @transform_0(%arg0: i32) -> (i32, i32) {
    %c0_i32 = arith.constant 0 : i32
    %c0_i32_0 = arith.constant 0 : i32
    return %c0_i32, %arg0 : i32, i32
  }
  func.func @transform_1(%arg0: i32) -> (i32, i32) {
    %c0_i32 = arith.constant 0 : i32
    %c0_i32_0 = arith.constant 0 : i32
    %c0_i32_1 = arith.constant 0 : i32
    return %c0_i32, %c0_i32_0 : i32, i32
  }
  func.func @transform_2(%arg0: i32) -> (i32, i32) {
    %c0_i32 = arith.constant 0 : i32
    %c0_i32_0 = arith.constant 0 : i32
    %c0_i32_1 = arith.constant 0 : i32
    return %c0_i32, %c0_i32_0 : i32, i32
  }
  func.func @transform_3(%arg0: i32) -> (i32, i32) {
    %c0_i32 = arith.constant 0 : i32
    %c0_i32_0 = arith.constant 0 : i32
    return %c0_i32, %arg0 : i32, i32
  }
}

</mosaic_0001>

<llo_original>
// kernel: tpu_custom_call.1
$region0: #{tpu_custom_call.1}
  #allocation0 [shape = 'u32[]', space=smem, size = 0x4, offset = 0x4, fixed_abs, tag = 'smem constant byte address 0x4 - core index']
  #allocation1 [shape = 'u32[144,128]{1,0:T(1,128)}', space=vmem, size = 0x12000, scoped, tag = 'internal scratch']
  %s0 = inlined_call_operand.hbm [shape: f32[4,512], index: 0, kind: input, shape index: {}]
  %s1 = inlined_call_operand.hbm [shape: f32[4,512], index: 1, kind: output, shape index: {}]
  %s2 = sld [smem:[#allocation0]]
  $region18: #{tpu_custom_call.1} parent=0
    _
  %s4 = ssub.s32 1, %s2
  %s5 = scalar_select 0, %s4, %s2
  $region1: #{tpu_custom_call.1} parent=0
    #allocation2 [shape = 'u8[8192]{0}', space=vmem, size = 0x2000, scoped, tag = 'input window, operand 0, single buffered']
    #allocation3 [shape = 's32[1]{0}', space=sflag, size = 0x4, scoped, tag = 'scoped memory for tpu_custom_call.1']
    #allocation4 [shape = 's32[1]{0}', space=sflag, size = 0x4, scoped, tag = 'scoped memory for tpu_custom_call.1']
    #allocation5 [shape = 'u8[8192]{0}', space=vmem, size = 0x2000, scoped, tag = 'output window, operand 0, single buffered']
    %6 = vsyncpa [#allocation3], 0
    %7 = vsyncpa [#allocation4], 0
    // Predicated region
    $region2: #{tpu_custom_call.1} parent=1 // pred_check
      _
    $region3: #{tpu_custom_call.1} parent=1 // pred_check_branch
      %9 = sbr.rel (0) target = $region5
    $region4: #{tpu_custom_call.1} parent=1 // pred_region
      %s11 = ssub.s32 256, 256
      %12 = vsyncadd [#allocation3], %s11
      %s14 = sshll.u32 [#allocation2], 4
      %s15 = int_to_ptr.vmem [resolvable:$true] %s14
      %17 = dma.hbm_to_vmem [thread:$0]  %s0, 256, %s15, [#allocation3]
    $region5: #{tpu_custom_call.1} parent=1 // pred_fallthru
      _
    // Predicated region
    $region6: #{tpu_custom_call.1} parent=1 // pred_check
      _
    $region7: #{tpu_custom_call.1} parent=1 // pred_check_branch
      %19 = sbr.rel (0) target = $region9
    $region8: #{tpu_custom_call.1} parent=1 // pred_region
      %20 = dma.done [#allocation3], 256
    $region9: #{tpu_custom_call.1} parent=1 // pred_fallthru
      _
    %v21 = vld [vmem:[#allocation2] sm:$0xff]
    %v22 = vld [vmem:[#allocation2 + $0x8] sm:$0xff]
    %v25 = vcombine.high %v21, %v21
    %v26 = vcombine.high %v22, %v22
    %29 = vrot.lane.b32.xlu0 %v21, 5
    %v30 = vpop.permute.xlu0 %29
    %31 = vrot.lane.b32.xlu0 %v25, 5
    %v32 = vpop.permute.xlu0 %31
    %33 = vrot.lane.b32.xlu0 %v22, 5
    %v34 = vpop.permute.xlu0 %33
    %35 = vrot.lane.b32.xlu0 %v26, 5
    %v36 = vpop.permute.xlu0 %35
    %v37 = vlaneseq
    %v38 = vand.u32 %v37, 127
    %vm39 = vcmp.lt.s32.totalorder %v38, 5
    %v40 = vsel %vm39, %v34, %v36
    %v41 = vsel %vm39, %v32, %v34
    %v42 = vsel %vm39, %v30, %v32
    %v43 = vsel %vm39, %v36, %v30
    %v48 = vcombine.low %v43, %v42
    %v49 = vcombine.low %v41, %v40
    %52 = vst [vmem:[#allocation5] sm:$0xff] %v48
    %53 = vst [vmem:[#allocation5 + $0x8] sm:$0xff] %v49
    // Predicated region
    $region10: #{tpu_custom_call.1} parent=1 // pred_check
      _
    $region11: #{tpu_custom_call.1} parent=1 // pred_check_branch
      %55 = sbr.rel (0) target = $region13
    $region12: #{tpu_custom_call.1} parent=1 // pred_region
      %s57 = ssub.s32 256, 256
      %58 = vsyncadd [#allocation4], %s57
      %s60 = sshll.u32 [#allocation5], 4
      %s61 = int_to_ptr.vmem [resolvable:$true] %s60
      %63 = dma.vmem_to_hbm [thread:$0]  %s61, 256, %s1, [#allocation4]
    $region13: #{tpu_custom_call.1} parent=1 // pred_fallthru
      _
    // Predicated region
    $region14: #{tpu_custom_call.1} parent=1 // pred_check
      _
    $region15: #{tpu_custom_call.1} parent=1 // pred_check_branch
      %65 = sbr.rel (0) target = $region17
    $region16: #{tpu_custom_call.1} parent=1 // pred_region
      %66 = dma.done [#allocation4], 256
    $region17: #{tpu_custom_call.1} parent=1 // pred_fallthru
      _
    %67 = vsyncpa [#allocation3], 1
    %68 = vsyncpa [#allocation4], 1

// kernel: _equivariant_conv_forward.1
$region0: #{_equivariant_conv_forward.1}
  #allocation0 [shape = 'u32[]', space=smem, size = 0x4, offset = 0x4, fixed_abs, tag = 'smem constant byte address 0x4 - core index']
  #allocation1 [shape = 'u32[144,128]{1,0:T(1,128)}', space=vmem, size = 0x12000, scoped, tag = 'internal scratch']
  %s0 = inlined_call_operand.vmem [shape: f32[4,512], index: 0, kind: input, shape index: {}]
  %s1 = inlined_call_operand.vmem [shape: f32[8,36], index: 1, kind: input, shape index: {}]
  %s2 = inlined_call_operand.vmem [shape: f32[4,1], index: 2, kind: input, shape index: {}]
  %s3 = inlined_call_operand.vmem [shape: f32[4,512], index: 3, kind: output, shape index: {}]
  %s4 = sld [smem:[#allocation0]]
  $region22: #{_equivariant_conv_forward.1} parent=0
    _
  %s6 = ssub.s32 1, %s4
  %s7 = scalar_select 0, %s6, %s4
  // Predicated region
  $region2: #{_equivariant_conv_forward.1} parent=0 // pred_check
    _
  $region3: #{_equivariant_conv_forward.1} parent=0 // pred_check_branch
    %9 = sbr.rel (0) target = $region5
  $region4: #{_equivariant_conv_forward.1} parent=0 // pred_region
    _
  $region5: #{_equivariant_conv_forward.1} parent=0 // pred_fallthru
    _
  // Predicated region
  $region6: #{_equivariant_conv_forward.1} parent=0 // pred_check
    _
  $region7: #{_equivariant_conv_forward.1} parent=0 // pred_check_branch
    %11 = sbr.rel (0) target = $region9
  $region8: #{_equivariant_conv_forward.1} parent=0 // pred_region
    _
  $region9: #{_equivariant_conv_forward.1} parent=0 // pred_fallthru
    _
  // Predicated region
  $region10: #{_equivariant_conv_forward.1} parent=0 // pred_check
    _
  $region11: #{_equivariant_conv_forward.1} parent=0 // pred_check_branch
    %13 = sbr.rel (0) target = $region13
  $region12: #{_equivariant_conv_forward.1} parent=0 // pred_region
    _
  $region13: #{_equivariant_conv_forward.1} parent=0 // pred_fallthru
    _
  %v14 = vld [vmem:[%s0] sm:$0xff]
  %v15 = vld [vmem:[%s0 + $0x8] sm:$0xff]
  %v16 = vlaneseq
  %v17 = vand.u32 %v16, 127
  %v18 = vadd.s32 %v17, 128
  %v19 = vadd.s32 %v17, 256
  %v20 = vadd.s32 %v17, 384
  %v21 = vand.u32 %v17, 15
  %v22 = vand.u32 %v18, 15
  %v23 = vand.u32 %v19, 15
  %v24 = vand.u32 %v20, 15
  %v25 = vshra.s32 %v17, 4
  %v26 = vshra.s32 %v18, 4
  %v27 = vshra.s32 %v19, 4
  %v28 = vshra.s32 %v20, 4
  %v29 = vand.u32 %v25, 15
  %v30 = vand.u32 %v26, 15
  %v31 = vand.u32 %v27, 15
  %v32 = vand.u32 %v28, 15
  %vm33 = vcmp.ge.s32.totalorder %v29, 1
  %vm34 = vcmp.ge.s32.totalorder %v30, 1
  %vm35 = vcmp.ge.s32.totalorder %v31, 1
  %vm36 = vcmp.ge.s32.totalorder %v32, 1
  %vm37 = vcmp.lt.s32.totalorder %v29, 15
  %vm38 = vcmp.lt.s32.totalorder %v30, 15
  %vm39 = vcmp.lt.s32.totalorder %v31, 15
  %vm40 = vcmp.lt.s32.totalorder %v32, 15
  %vm41 = vcmp.ge.s32.totalorder %v21, 1
  %vm42 = vcmp.ge.s32.totalorder %v22, 1
  %vm43 = vcmp.ge.s32.totalorder %v23, 1
  %vm44 = vcmp.ge.s32.totalorder %v24, 1
  %vm45 = vcmp.lt.s32.totalorder %v21, 15
  %vm46 = vcmp.lt.s32.totalorder %v22, 15
  %vm47 = vcmp.lt.s32.totalorder %v23, 15
  %vm48 = vcmp.lt.s32.totalorder %v24, 15
  %v51 = vcombine.high %v14, %v14
  %v52 = vcombine.high %v15, %v15
  %53 = vrot.lane.b32.xlu0 %v14, 17
  %v54 = vpop.permute.xlu0 %53
  %55 = vrot.lane.b32.xlu0 %v51, 17
  %v56 = vpop.permute.xlu0 %55
  %57 = vrot.lane.b32.xlu0 %v15, 17
  %v58 = vpop.permute.xlu0 %57
  %59 = vrot.lane.b32.xlu0 %v52, 17
  %v60 = vpop.permute.xlu0 %59
  %vm61 = vcmask 138240
  %v62 = vsel %vm61, %v54, %v56
  %v63 = vsel %vm61, %v56, %v58
  %v64 = vsel %vm61, %v58, %v60
  %v69 = vsel %vm61, 0.0, %v54
  %vm70 = vmand %vm33, %vm41
  %vm71 = vmand %vm34, %vm42
  %vm72 = vmand %vm35, %vm43
  %vm73 = vmand %vm36, %vm44
  %v74 = vsel %vm70, 1, 0
  %v75 = vsel %vm71, 1, 0
  %v76 = vsel %vm72, 1, 0
  %v77 = vsel %vm73, 1, 0
  %vm78 = vcmp.eq.s32.totalorder %v74, 1
  %vm79 = vcmp.eq.s32.totalorder %v75, 1
  %vm80 = vcmp.eq.s32.totalorder %v76, 1
  %vm81 = vcmp.eq.s32.totalorder %v77, 1
  %v82 = vsel %vm78, %v69, 0.0
  %v83 = vsel %vm79, %v62, 0.0
  %v84 = vsel %vm80, %v63, 0.0
  %v85 = vsel %vm81, %v64, 0.0
  %86 = vrot.lane.b32.xlu0 %v14, 16
  %v87 = vpop.permute.xlu0 %86
  %88 = vrot.lane.b32.xlu0 %v51, 16
  %v89 = vpop.permute.xlu0 %88
  %90 = vrot.lane.b32.xlu0 %v15, 16
  %v91 = vpop.permute.xlu0 %90
  %92 = vrot.lane.b32.xlu0 %v52, 16
  %v93 = vpop.permute.xlu0 %92
  %vm94 = vcmask 130048
  %v95 = vsel %vm94, %v87, %v89
  %v96 = vsel %vm94, %v89, %v91
  %v97 = vsel %vm94, %v91, %v93
  %v102 = vsel %vm94, 0.0, %v87
  %v103 = vsel %vm33, 1, 0
  %v104 = vsel %vm34, 1, 0
  %v105 = vsel %vm35, 1, 0
  %v106 = vsel %vm36, 1, 0
  %vm107 = vcmp.eq.s32.totalorder %v103, 1
  %vm108 = vcmp.eq.s32.totalorder %v104, 1
  %vm109 = vcmp.eq.s32.totalorder %v105, 1
  %vm110 = vcmp.eq.s32.totalorder %v106, 1
  %v111 = vsel %vm107, %v102, 0.0
  %v112 = vsel %vm108, %v95, 0.0
  %v113 = vsel %vm109, %v96, 0.0
  %v114 = vsel %vm110, %v97, 0.0
  %115 = vrot.lane.b32.xlu0 %v14, 15
  %v116 = vpop.permute.xlu0 %115
  %117 = vrot.lane.b32.xlu0 %v51, 15
  %v118 = vpop.permute.xlu0 %117
  %119 = vrot.lane.b32.xlu0 %v15, 15
  %v120 = vpop.permute.xlu0 %119
  %121 = vrot.lane.b32.xlu0 %v52, 15
  %v122 = vpop.permute.xlu0 %121
  %vm123 = vcmask 121856
  %v124 = vsel %vm123, %v116, %v118
  %v125 = vsel %vm123, %v118, %v120
  %v126 = vsel %vm123, %v120, %v122
  %v131 = vsel %vm123, 0.0, %v116
  %vm132 = vmand %vm33, %vm45
  %vm133 = vmand %vm34, %vm46
  %vm134 = vmand %vm35, %vm47
  %vm135 = vmand %vm36, %vm48
  %v136 = vsel %vm132, 1, 0
  %v137 = vsel %vm133, 1, 0
  %v138 = vsel %vm134, 1, 0
  %v139 = vsel %vm135, 1, 0
  %vm140 = vcmp.eq.s32.totalorder %v136, 1
  %vm141 = vcmp.eq.s32.totalorder %v137, 1
  %vm142 = vcmp.eq.s32.totalorder %v138, 1
  %vm143 = vcmp.eq.s32.totalorder %v139, 1
  %v144 = vsel %vm140, %v131, 0.0
  %v145 = vsel %vm141, %v124, 0.0
  %v146 = vsel %vm142, %v125, 0.0
  %v147 = vsel %vm143, %v126, 0.0
  %148 = vrot.lane.b32.xlu0 %v14, 1
  %v149 = vpop.permute.xlu0 %148
  %150 = vrot.lane.b32.xlu0 %v51, 1
  %v151 = vpop.permute.xlu0 %150
  %152 = vrot.lane.b32.xlu0 %v15, 1
  %v153 = vpop.permute.xlu0 %152
  %154 = vrot.lane.b32.xlu0 %v52, 1
  %v155 = vpop.permute.xlu0 %154
  %vm156 = vcmask 7168
  %v157 = vsel %vm156, %v149, %v151
  %v158 = vsel %vm156, %v151, %v153
  %v159 = vsel %vm156, %v153, %v155
  %v164 = vsel %vm156, 0.0, %v149
  %v165 = vsel %vm41, 1, 0
  %v166 = vsel %vm42, 1, 0
  %v167 = vsel %vm43, 1, 0
  %v168 = vsel %vm44, 1, 0
  %vm169 = vcmp.eq.s32.totalorder %v165, 1
  %vm170 = vcmp.eq.s32.totalorder %v166, 1
  %vm171 = vcmp.eq.s32.totalorder %v167, 1
  %vm172 = vcmp.eq.s32.totalorder %v168, 1
  %v173 = vsel %vm169, %v164, 0.0
  %v174 = vsel %vm170, %v157, 0.0
  %v175 = vsel %vm171, %v158, 0.0
  %v176 = vsel %vm172, %v159, 0.0
  %177 = vrot.lane.b32.xlu0 %v14, 127
  %v178 = vpop.permute.xlu0 %177
  %179 = vrot.lane.b32.xlu0 %v51, 127
  %v180 = vpop.permute.xlu0 %179
  %181 = vrot.lane.b32.xlu0 %v15, 127
  %v182 = vpop.permute.xlu0 %181
  %183 = vrot.lane.b32.xlu0 %v52, 127
  %v184 = vpop.permute.xlu0 %183
  %vm185 = vcmask 1039360
  %v186 = vsel %vm185, %v178, %v180
  %v187 = vsel %vm185, %v180, %v182
  %v188 = vsel %vm185, %v182, %v184
  %v193 = vsel %vm185, %v184, 0.0
  %v194 = vsel %vm45, 1, 0
  %v195 = vsel %vm46, 1, 0
  %v196 = vsel %vm47, 1, 0
  %v197 = vsel %vm48, 1, 0
  %vm198 = vcmp.eq.s32.totalorder %v194, 1
  %vm199 = vcmp.eq.s32.totalorder %v195, 1
  %vm200 = vcmp.eq.s32.totalorder %v196, 1
  %vm201 = vcmp.eq.s32.totalorder %v197, 1
  %v202 = vsel %vm198, %v186, 0.0
  %v203 = vsel %vm199, %v187, 0.0
  %v204 = vsel %vm200, %v188, 0.0
  %v205 = vsel %vm201, %v193, 0.0
  %206 = vrot.lane.b32.xlu0 %v14, 113
  %v207 = vpop.permute.xlu0 %206
  %208 = vrot.lane.b32.xlu0 %v51, 113
  %v209 = vpop.permute.xlu0 %208
  %210 = vrot.lane.b32.xlu0 %v15, 113
  %v211 = vpop.permute.xlu0 %210
  %212 = vrot.lane.b32.xlu0 %v52, 113
  %v213 = vpop.permute.xlu0 %212
  %vm214 = vcmask 924672
  %v215 = vsel %vm214, %v207, %v209
  %v216 = vsel %vm214, %v209, %v211
  %v217 = vsel %vm214, %v211, %v213
  %v222 = vsel %vm214, %v213, 0.0
  %vm223 = vmand %vm37, %vm41
  %vm224 = vmand %vm38, %vm42
  %vm225 = vmand %vm39, %vm43
  %vm226 = vmand %vm40, %vm44
  %v227 = vsel %vm223, 1, 0
  %v228 = vsel %vm224, 1, 0
  %v229 = vsel %vm225, 1, 0
  %v230 = vsel %vm226, 1, 0
  %vm231 = vcmp.eq.s32.totalorder %v227, 1
  %vm232 = vcmp.eq.s32.totalorder %v228, 1
  %vm233 = vcmp.eq.s32.totalorder %v229, 1
  %vm234 = vcmp.eq.s32.totalorder %v230, 1
  %v235 = vsel %vm231, %v215, 0.0
  %v236 = vsel %vm232, %v216, 0.0
  %v237 = vsel %vm233, %v217, 0.0
  %v238 = vsel %vm234, %v222, 0.0
  %239 = vrot.lane.b32.xlu0 %v14, 112
  %v240 = vpop.permute.xlu0 %239
  %241 = vrot.lane.b32.xlu0 %v51, 112
  %v242 = vpop.permute.xlu0 %241
  %243 = vrot.lane.b32.xlu0 %v15, 112
  %v244 = vpop.permute.xlu0 %243
  %245 = vrot.lane.b32.xlu0 %v52, 112
  %v246 = vpop.permute.xlu0 %245
  %vm247 = vcmask 916480
  %v248 = vsel %vm247, %v240, %v242
  %v249 = vsel %vm247, %v242, %v244
  %v250 = vsel %vm247, %v244, %v246
  %v255 = vsel %vm247, %v246, 0.0
  %v256 = vsel %vm37, 1, 0
  %v257 = vsel %vm38, 1, 0
  %v258 = vsel %vm39, 1, 0
  %v259 = vsel %vm40, 1, 0
  %vm260 = vcmp.eq.s32.totalorder %v256, 1
  %vm261 = vcmp.eq.s32.totalorder %v257, 1
  %vm262 = vcmp.eq.s32.totalorder %v258, 1
  %vm263 = vcmp.eq.s32.totalorder %v259, 1
  %v264 = vsel %vm260, %v248, 0.0
  %v265 = vsel %vm261, %v249, 0.0
  %v266 = vsel %vm262, %v250, 0.0
  %v267 = vsel %vm263, %v255, 0.0
  %268 = vrot.lane.b32.xlu0 %v14, 111
  %v269 = vpop.permute.xlu0 %268
  %270 = vrot.lane.b32.xlu0 %v51, 111
  %v271 = vpop.permute.xlu0 %270
  %272 = vrot.lane.b32.xlu0 %v15, 111
  %v273 = vpop.permute.xlu0 %272
  %274 = vrot.lane.b32.xlu0 %v52, 111
  %v275 = vpop.permute.xlu0 %274
  %vm276 = vcmask 908288
  %v277 = vsel %vm276, %v269, %v271
  %v278 = vsel %vm276, %v271, %v273
  %v279 = vsel %vm276, %v273, %v275
  %v284 = vsel %vm276, %v275, 0.0
  %vm285 = vmand %vm37, %vm45
  %vm286 = vmand %vm38, %vm46
  %vm287 = vmand %vm39, %vm47
  %vm288 = vmand %vm40, %vm48
  %v289 = vsel %vm285, 1, 0
  %v290 = vsel %vm286, 1, 0
  %v291 = vsel %vm287, 1, 0
  %v292 = vsel %vm288, 1, 0
  %vm293 = vcmp.eq.s32.totalorder %v289, 1
  %vm294 = vcmp.eq.s32.totalorder %v290, 1
  %vm295 = vcmp.eq.s32.totalorder %v291, 1
  %vm296 = vcmp.eq.s32.totalorder %v292, 1
  %v297 = vsel %vm293, %v277, 0.0
  %v298 = vsel %vm294, %v278, 0.0
  %v299 = vsel %vm295, %v279, 0.0
  %v300 = vsel %vm296, %v284, 0.0
  %v305 = vrot.slane %v111, 4
  %v306 = vrot.slane %v112, 4
  %v307 = vrot.slane %v113, 4
  %v308 = vrot.slane %v114, 4
  %v317 = vrot.slane %v173, 4
  %v318 = vrot.slane %v174, 4
  %v319 = vrot.slane %v175, 4
  %v320 = vrot.slane %v176, 4
  %v331 = vrot.slane %v202, 4
  %v332 = vrot.slane %v203, 4
  %v333 = vrot.slane %v204, 4
  %v334 = vrot.slane %v205, 4
  %v343 = vrot.slane %v264, 4
  %v344 = vrot.slane %v265, 4
  %v345 = vrot.slane %v266, 4
  %v346 = vrot.slane %v267, 4
  %vm351 = vcmask 1043456
  %v352 = vsel %vm351, %v82, %v305
  %v353 = vsel %vm351, %v83, %v306
  %v354 = vsel %vm351, %v84, %v307
  %v355 = vsel %vm351, %v85, %v308
  %v356 = vsel %vm351, %v144, %v317
  %v357 = vsel %vm351, %v145, %v318
  %v358 = vsel %vm351, %v146, %v319
  %v359 = vsel %vm351, %v147, %v320
  %v360 = vsel %vm351, %v14, %v331
  %v361 = vsel %vm351, %v51, %v332
  %v362 = vsel %vm351, %v15, %v333
  %v363 = vsel %vm351, %v52, %v334
  %v364 = vsel %vm351, %v235, %v343
  %v365 = vsel %vm351, %v236, %v344
  %v366 = vsel %vm351, %v237, %v345
  %v367 = vsel %vm351, %v238, %v346
  %v368 = vld [vmem:[%s1] sm:$0xff]
  %vm369 = vcmask 293888
  %v371 = vsel %vm369, %v368, 0
  %v374 = vsel %vm351, %v297, 0
  %v377 = vsel %vm351, %v298, 0
  %v380 = vsel %vm351, %v299, 0
  %v383 = vsel %vm351, %v300, 0
  %385 = vmatprep.subr.mxu0 %v353
  %386 = vmatpush1.msra.mxu0 %v352
  %387 = vmatprep.subr.mxu0 %v357
  %388 = vmatpush1.msra.mxu0 %v356
  %389 = vmatprep.subr.mxu0 %v361
  %390 = vmatpush1.msra.mxu0 %v360
  %391 = vmatprep.subr.mxu0 %v365
  %392 = vmatpush1.msra.mxu0 %v364
  %393 = vmatprep.subr.mxu0 %v377
  %394 = vmatpush1.msra.mxu0 %v374
  %395 = vmatprep.subr.mxu0 0.0
  %396 = vmatpush1.msra.mxu0 0.0
  %397 = vmatprep.subr.mxu0 0.0
  %398 = vmatpush1.msra.mxu0 0.0
  %399 = vmatprep.subr.mxu0 0.0
  %400 = vmatpush1.msra.mxu0 0.0
  %401 = vmatprep.subr.mxu0 0.0
  %402 = vmatpush1.msra.mxu0 0.0
  %403 = vmatprep.subr.mxu0 0.0
  %404 = vmatpush1.msra.mxu0 0.0
  %405 = vmatprep.subr.mxu0 0.0
  %406 = vmatpush1.msra.mxu0 0.0
  %407 = vmatprep.subr.mxu0 0.0
  %408 = vmatpush1.msra.mxu0 0.0
  %409 = vmatprep.subr.mxu0 0.0
  %410 = vmatpush1.msra.mxu0 0.0
  %411 = vmatprep.subr.mxu0 0.0
  %412 = vmatpush1.msra.mxu0 0.0
  %413 = vmatprep.subr.mxu0 0.0
  %414 = vmatpush1.msra.mxu0 0.0
  %415 = vmatprep.subr.mxu0 0.0
  %416 = vmatpush1.msra.mxu0 0.0
  %417 = vmatprep.subr.mxu0 0.0
  %418 = vmatpush1.msra.mxu0 0.0
  %419 = vmatprep.subr.mxu0 0.0
  %420 = vmatpush1.msra.mxu0 0.0
  %421 = vmatprep.subr.mxu0 0.0
  %422 = vmatpush1.msra.mxu0 0.0
  %423 = vmatprep.subr.mxu0 0.0
  %424 = vmatpush1.msra.mxu0 0.0
  %425 = vmatprep.subr.mxu0 0.0
  %426 = vmatpush1.msra.mxu0 0.0
  %427 = vmatprep.subr.mxu0 0.0
  %428 = vmatpush1.msra.mxu0 0.0
  %429 = vmatprep.subr.mxu0 0.0
  %430 = vmatpush1.msra.mxu0 0.0
  %431 = vmatprep.subr.mxu0 0.0
  %432 = vmatpush1.msra.mxu0 0.0
  %433 = vmatprep.subr.mxu0 0.0
  %434 = vmatpush1.msra.mxu0 0.0
  %435 = vmatprep.subr.mxu0 0.0
  %436 = vmatpush1.msra.mxu0 0.0
  %437 = vmatprep.subr.mxu0 0.0
  %438 = vmatpush1.msra.mxu0 0.0
  %439 = vmatprep.subr.mxu0 0.0
  %440 = vmatpush1.msra.mxu0 0.0
  %441 = vmatprep.subr.mxu0 0.0
  %442 = vmatpush1.msra.mxu0 0.0
  %443 = vmatprep.subr.mxu0 0.0
  %444 = vmatpush1.msra.mxu0 0.0
  %445 = vmatprep.subr.mxu0 0.0
  %446 = vmatpush1.msra.mxu0 0.0
  %447 = vmatprep.subr.mxu0 0.0
  %448 = vmatpush1.msra.mxu0 0.0
  %449 = vmatprep.mubr.f32.mxu0 0.0
  %450 = vmatmul.mubr.f32.gmra.mrb[0].mxu0 %v371
  %v451 = vpop.f32.mrb[0].mxu0
  %v452 = vadd.f32 0.0, %v451
  %v453 = vpop.f32.mrb[0].mxu0
  %v454 = vadd.f32 0.0, %v453
  %455 = vdwg.mxu0
  %456 = vmatprep.subr.mxu0 %v355
  %457 = vmatpush1.msra.mxu0 %v354
  %458 = vmatprep.subr.mxu0 %v359
  %459 = vmatpush1.msra.mxu0 %v358
  %460 = vmatprep.subr.mxu0 %v363
  %461 = vmatpush1.msra.mxu0 %v362
  %462 = vmatprep.subr.mxu0 %v367
  %463 = vmatpush1.msra.mxu0 %v366
  %464 = vmatprep.subr.mxu0 %v383
  %465 = vmatpush1.msra.mxu0 %v380
  %466 = vmatprep.subr.mxu0 0.0
  %467 = vmatpush1.msra.mxu0 0.0
  %468 = vmatprep.subr.mxu0 0.0
  %469 = vmatpush1.msra.mxu0 0.0
  %470 = vmatprep.subr.mxu0 0.0
  %471 = vmatpush1.msra.mxu0 0.0
  %472 = vmatprep.subr.mxu0 0.0
  %473 = vmatpush1.msra.mxu0 0.0
  %474 = vmatprep.subr.mxu0 0.0
  %475 = vmatpush1.msra.mxu0 0.0
  %476 = vmatprep.subr.mxu0 0.0
  %477 = vmatpush1.msra.mxu0 0.0
  %478 = vmatprep.subr.mxu0 0.0
  %479 = vmatpush1.msra.mxu0 0.0
  %480 = vmatprep.subr.mxu0 0.0
  %481 = vmatpush1.msra.mxu0 0.0
  %482 = vmatprep.subr.mxu0 0.0
  %483 = vmatpush1.msra.mxu0 0.0
  %484 = vmatprep.subr.mxu0 0.0
  %485 = vmatpush1.msra.mxu0 0.0
  %486 = vmatprep.subr.mxu0 0.0
  %487 = vmatpush1.msra.mxu0 0.0
  %488 = vmatprep.subr.mxu0 0.0
  %489 = vmatpush1.msra.mxu0 0.0
  %490 = vmatprep.subr.mxu0 0.0
  %491 = vmatpush1.msra.mxu0 0.0
  %492 = vmatprep.subr.mxu0 0.0
  %493 = vmatpush1.msra.mxu0 0.0
  %494 = vmatprep.subr.mxu0 0.0
  %495 = vmatpush1.msra.mxu0 0.0
  %496 = vmatprep.subr.mxu0 0.0
  %497 = vmatpush1.msra.mxu0 0.0
  %498 = vmatprep.subr.mxu0 0.0
  %499 = vmatpush1.msra.mxu0 0.0
  %500 = vmatprep.subr.mxu0 0.0
  %501 = vmatpush1.msra.mxu0 0.0
  %502 = vmatprep.subr.mxu0 0.0
  %503 = vmatpush1.msra.mxu0 0.0
  %504 = vmatprep.subr.mxu0 0.0
  %505 = vmatpush1.msra.mxu0 0.0
  %506 = vmatprep.subr.mxu0 0.0
  %507 = vmatpush1.msra.mxu0 0.0
  %508 = vmatprep.subr.mxu0 0.0
  %509 = vmatpush1.msra.mxu0 0.0
  %510 = vmatprep.subr.mxu0 0.0
  %511 = vmatpush1.msra.mxu0 0.0
  %512 = vmatprep.subr.mxu0 0.0
  %513 = vmatpush1.msra.mxu0 0.0
  %514 = vmatprep.subr.mxu0 0.0
  %515 = vmatpush1.msra.mxu0 0.0
  %516 = vmatprep.subr.mxu0 0.0
  %517 = vmatpush1.msra.mxu0 0.0
  %518 = vmatprep.subr.mxu0 0.0
  %519 = vmatpush1.msra.mxu0 0.0
  %520 = vmatprep.mubr.f32.mxu0 0.0
  %521 = vmatmul.mubr.f32.gmra.mrb[0].mxu0 %v371
  %v522 = vpop.f32.mrb[0].mxu0
  %v523 = vadd.f32 0.0, %v522
  %v524 = vpop.f32.mrb[0].mxu0
  %v525 = vadd.f32 0.0, %v524
  %526 = vdwg.mxu0
  %v527 = vld [vmem:[%s2] sm:$0xf]
  %529 = vset.pattern.permute.xlu0 0
  %530 = vperm.xlu0 %529, %v527
  %v531 = vpop.permute.xlu0 %530
  %v533 = vadd.f32 %v452, %v531
  %v534 = vadd.f32 %v454, %v531
  %v535 = vadd.f32 %v523, %v531
  %v536 = vadd.f32 %v525, %v531
  %v541 = vcombine.low %v533, %v534
  %v542 = vcombine.low %v535, %v536
  %v545 = vsub.f32 %v14, %v541
  %v546 = vsub.f32 %v15, %v542
  %547 = vst [vmem:[%s3] sm:$0xff] %v545
  %548 = vst [vmem:[%s3 + $0x8] sm:$0xff] %v546
  // Predicated region
  $region14: #{_equivariant_conv_forward.1} parent=0 // pred_check
    _
  $region15: #{_equivariant_conv_forward.1} parent=0 // pred_check_branch
    %550 = sbr.rel (0) target = $region17
  $region16: #{_equivariant_conv_forward.1} parent=0 // pred_region
    _
  $region17: #{_equivariant_conv_forward.1} parent=0 // pred_fallthru
    _
  // Predicated region
  $region18: #{_equivariant_conv_forward.1} parent=0 // pred_check
    _
  $region19: #{_equivariant_conv_forward.1} parent=0 // pred_check_branch
    %552 = sbr.rel (0) target = $region21
  $region20: #{_equivariant_conv_forward.1} parent=0 // pred_region
    _
  $region21: #{_equivariant_conv_forward.1} parent=0 // pred_fallthru
    _

</llo_original>
